<compile_context>
chip_gen: v7x
topology: tpu7x:2x2x1
jax: 0.10.0
libtpu: 0.0.40
codegen_flags: <defaults>
</compile_context>

<pallas_src>
import functools

import jax
import jax.numpy as jnp
from jax.experimental import pallas as pl
from jax.experimental.pallas import tpu as pltpu


def _attention_kernel(x_ref, w_ref, b_ref, o_ref, *, slab_rows=None):
    # x_ref: (TB, S, F), w_ref: (1, 1, F), b_ref: (1, S, 1)
    # o_ref: (TB, F)            if slab_rows is None
    #        (slab_rows, 128)   otherwise (lane-dense writeback)
    x = x_ref[...].astype(jnp.float32)
    w = w_ref[...].astype(jnp.float32)
    b = b_ref[...].astype(jnp.float32)

    # Scores kept in (TB, S, 1) layout throughout the softmax so that the
    # final `a * x` broadcast needs no (TB,S) -> (TB,S,1) relayout.
    eij = jnp.sum(x * w, axis=-1, keepdims=True)        # (TB, S, 1) lane reduce
    eij = jnp.tanh(eij + b)                              # EUP

    # Numerically stable softmax over the step axis (sublane reduces).
    m = jnp.max(eij, axis=1, keepdims=True)              # (TB, 1, 1)
    p = jnp.exp(eij - m)
    denom = jnp.sum(p, axis=1, keepdims=True)            # (TB, 1, 1)
    a = p / denom                                        # exact (tight numerics)

    # Weighted sum over steps: VPU broadcast-mul + sublane reduce (no MXU).
    out = jnp.sum(a * x, axis=1)                         # (TB, F)

    if slab_rows is None:
        o_ref[...] = out.astype(o_ref.dtype)
    else:
        # Lane-dense store: fold batch rows into the lane axis. The reshape is
        # XLU relayout work, which has slack in this mem-bound kernel.
        o_ref[...] = out.reshape(slab_rows, 128).astype(o_ref.dtype)


def _vmem_budget_bytes():
    """Scoped-VMEM budget derived from the chip (v5e/v6e: 128 MiB physical,
    v7x: 64 MiB). Use half of physical as the scoped limit."""
    try:
        cap = int(pltpu.get_tpu_info().vmem_capacity_bytes)
    except Exception:
        cap = 64 << 20  # conservative fallback (also covers interpret mode)
    return cap // 2


def _pick_block_b(B, S, F, itemsize, vmem_limit_bytes):
    """Largest batch tile that fits the padding-aware VMEM accounting while
    keeping enough grid steps for pipelining / v7x dual-TC sharding."""
    # Padded VMEM footprint of one batch row of x: sublane dim -> mult of 8,
    # lane dim -> mult of 128 (for S=8, F=32 this is 4x the nominal bytes).
    s_pad = pl.cdiv(S, 8) * 8
    f_pad = pl.cdiv(F, 128) * 128
    x_row = s_pad * f_pad * itemsize
    out_row = f_pad * itemsize
    # 2 pipeline buffers for x + ~2 block-sized elementwise temporaries
    # (x*w and a*x, in case Mosaic does not fuse them) + 2 output buffers.
    per_row = 4 * x_row + 2 * out_row
    budget = (8 * vmem_limit_bytes) // 10          # ~20% headroom
    rows = max(1, budget // per_row)
    # Guarantee >=2 grid steps (4 for larger batches) when B permits, so both
    # v7x TensorCores get work; harmless on single-TC v5e/v6e.
    if B > 8:
        min_steps = 4 if B >= 64 else 2
        rows = min(rows, pl.cdiv(B, min_steps))
    rows = min(rows, B)
    if rows >= 8:
        rows = (rows // 8) * 8                     # 8-aligned sublane tiles
    return max(1, rows)


def attention_forward(x, weight, bias, *, block_b=None):
    """x: (B, S, F) f32, weight: (F, 1) f32, bias: (S,) f32 -> (B, F) f32."""
    B, S, F = x.shape

    vmem_budget = _vmem_budget_bytes()
    if block_b is None:
        block_b = _pick_block_b(B, S, F, x.dtype.itemsize, vmem_budget)
    block_b = max(1, min(block_b, B))

    w3d = weight.reshape(1, 1, F)   # lane-dense weight
    b3d = bias.reshape(1, S, 1)     # matches the (TB, S, 1) score layout

    num_blocks = pl.cdiv(B, block_b)
    grid = (num_blocks,)

    # Lane-dense output writeback: with F < 128 a (block_b, F) out block uses
    # masked partial stores per row; when alignment permits, present the
    # output as a (B*F/128, 128) slab so every store is a full 128-lane vreg.
    lane_dense = (F < 128
                  and B % block_b == 0
                  and (block_b * F) % 1024 == 0)   # slab block rows mult of 8
    if lane_dense:
        slab_rows = (block_b * F) // 128
        out_shape = jax.ShapeDtypeStruct((B * F // 128, 128), x.dtype)
        out_spec = pl.BlockSpec((slab_rows, 128), lambda i: (i, 0))
    else:
        slab_rows = None
        out_shape = jax.ShapeDtypeStruct((B, F), x.dtype)
        out_spec = pl.BlockSpec((block_b, F), lambda i: (i, 0))

    kernel = functools.partial(_attention_kernel, slab_rows=slab_rows)

    out = pl.pallas_call(
        kernel,
        out_shape=out_shape,
        grid_spec=pltpu.PrefetchScalarGridSpec(
            num_scalar_prefetch=0,
            grid=grid,
            in_specs=[
                # Full (S, F) trailing dims per block -> unit-stride HBM DMA.
                pl.BlockSpec((block_b, S, F), lambda i: (i, 0, 0)),
                pl.BlockSpec((1, 1, F), lambda i: (0, 0, 0)),  # resident
                pl.BlockSpec((1, S, 1), lambda i: (0, 0, 0)),  # resident
            ],
            out_specs=out_spec,
        ),
        compiler_params=pltpu.CompilerParams(
            dimension_semantics=("parallel",),
            vmem_limit_bytes=vmem_budget,
        ),
    )(x, w3d, b3d)

    if lane_dense:
        out = out.reshape(B, F)
    return out


def _reference(x, weight, bias):
    # Pure-JAX reference mirroring the PyTorch forward exactly.
    B, S, F = x.shape
    eij = (x.reshape(B * S, F) @ weight).reshape(B, S) + bias
    eij = jnp.tanh(eij)
    a = jax.nn.softmax(eij, axis=1)
    return jnp.sum(x * a[..., None], axis=1)


def _check(B, S, F, seed):
    key = jax.random.PRNGKey(seed)
    kx, kw = jax.random.split(key)
    x = jax.random.normal(kx, (B, S, F), dtype=jnp.float32)
    # xavier_uniform_ on a (feature_dim, 1) weight: bound = sqrt(6 / (F + 1))
    bound = (6.0 / (F + 1)) ** 0.5
    weight = jax.random.uniform(kw, (F, 1), dtype=jnp.float32,
                                minval=-bound, maxval=bound)
    bias = jnp.full((S,), 0.1, dtype=jnp.float32)

    out = attention_forward(x, weight, bias)
    jax.block_until_ready(out)

    ref = _reference(x, weight, bias)
    assert out.shape == (B, F)
    err = jnp.max(jnp.abs(out - ref))
    assert jnp.allclose(out, ref, atol=1e-5, rtol=1e-5), (
        f"B={B} S={S} F={F}: max abs err {err}")


if __name__ == "__main__":
    # Small shapes consistent with the module: feature_dim=32, step_dim=8.
    _check(B=2, S=8, F=32, seed=0)     # single-block path, (B, F) writeback
    _check(B=128, S=8, F=32, seed=0)   # multi-block grid + lane-dense slab path
    print("KERNEL_OK")
</pallas_src>

<mosaic_0001>
module attributes {stable_mosaic.version = 11 : i64} {
  func.func @_attention_kernel(%arg0: i32, %arg1: memref<2x8x32xf32, #tpu.memory_space<vmem>>, %arg2: memref<1x1x32xf32, #tpu.memory_space<vmem>>, %arg3: memref<1x8x1xf32, #tpu.memory_space<vmem>>, %arg4: memref<2x32xf32, #tpu.memory_space<vmem>>) attributes {dimension_semantics = [#tpu.dimension_semantics<parallel>], iteration_bounds = array<i64: 1>, scalar_prefetch = 0 : i64, scratch_operands = 0 : i64, tpu.core_type = #tpu.core_type<tc>, window_params = [{transform_indices = @transform_0, window_bounds = array<i64: 2, 8, 32>}, {pipeline_mode = #tpu.pipeline_mode<synchronous>, transform_indices = @transform_1, window_bounds = array<i64: 1, 1, 32>}, {pipeline_mode = #tpu.pipeline_mode<synchronous>, transform_indices = @transform_2, window_bounds = array<i64: 1, 8, 1>}, {transform_indices = @transform_3, window_bounds = array<i64: 2, 32>}]} {
    %c0 = arith.constant 0 : index
    %c0_0 = arith.constant 0 : index
    %c0_1 = arith.constant 0 : index
    %0 = vector.load %arg1[%c0, %c0_0, %c0_1] : memref<2x8x32xf32, #tpu.memory_space<vmem>>, vector<2x8x32xf32>
    %c0_2 = arith.constant 0 : index
    %c0_3 = arith.constant 0 : index
    %c0_4 = arith.constant 0 : index
    %1 = vector.load %arg2[%c0_2, %c0_3, %c0_4] : memref<1x1x32xf32, #tpu.memory_space<vmem>>, vector<1x1x32xf32>
    %c0_5 = arith.constant 0 : index
    %c0_6 = arith.constant 0 : index
    %c0_7 = arith.constant 0 : index
    %2 = vector.load %arg3[%c0_5, %c0_6, %c0_7] : memref<1x8x1xf32, #tpu.memory_space<vmem>>, vector<1x8x1xf32>
    %3 = vector.broadcast %1 : vector<1x1x32xf32> to vector<2x8x32xf32>
    %4 = arith.mulf %0, %3 : vector<2x8x32xf32>
    %cst = arith.constant dense<0.000000e+00> : vector<2x8xf32>
    %5 = vector.multi_reduction <add>, %4, %cst [2] : vector<2x8x32xf32> to vector<2x8xf32>
    %6 = vector.shape_cast %5 : vector<2x8xf32> to vector<2x8x1xf32>
    %7 = vector.broadcast %2 : vector<1x8x1xf32> to vector<2x8x1xf32>
    %8 = arith.addf %6, %7 : vector<2x8x1xf32>
    %9 = math.tanh %8 : vector<2x8x1xf32>
    %cst_8 = arith.constant dense<0xFF800000> : vector<2x1xf32>
    %10 = vector.multi_reduction <maximumf>, %9, %cst_8 [1] : vector<2x8x1xf32> to vector<2x1xf32>
    %11 = vector.shape_cast %10 : vector<2x1xf32> to vector<2x1x1xf32>
    %12 = vector.broadcast %11 : vector<2x1x1xf32> to vector<2x8x1xf32>
    %13 = arith.subf %9, %12 : vector<2x8x1xf32>
    %14 = math.exp %13 : vector<2x8x1xf32>
    %cst_9 = arith.constant dense<0.000000e+00> : vector<2x1xf32>
    %15 = vector.multi_reduction <add>, %14, %cst_9 [1] : vector<2x8x1xf32> to vector<2x1xf32>
    %16 = vector.shape_cast %15 : vector<2x1xf32> to vector<2x1x1xf32>
    %17 = vector.broadcast %16 : vector<2x1x1xf32> to vector<2x8x1xf32>
    %18 = arith.divf %14, %17 : vector<2x8x1xf32>
    %19 = vector.broadcast %18 : vector<2x8x1xf32> to vector<2x8x32xf32>
    %20 = arith.mulf %19, %0 : vector<2x8x32xf32>
    %cst_10 = arith.constant dense<0.000000e+00> : vector<2x32xf32>
    %21 = vector.multi_reduction <add>, %20, %cst_10 [1] : vector<2x8x32xf32> to vector<2x32xf32>
    %c0_11 = arith.constant 0 : index
    %c0_12 = arith.constant 0 : index
    %22 = vector.load %arg4[%c0_11, %c0_12] : memref<2x32xf32, #tpu.memory_space<vmem>>, vector<2x32xf32>
    tpu.vector_store %arg4[%c0_11, %c0_12], %21 {strides = array<i32>} : memref<2x32xf32, #tpu.memory_space<vmem>>, vector<2x32xf32>,
    return
  }
  func.func @transform_0(%arg0: i32) -> (i32, i32, i32) {
    %c0_i32 = arith.constant 0 : i32
    %c0_i32_0 = arith.constant 0 : i32
    %c0_i32_1 = arith.constant 0 : i32
    return %arg0, %c0_i32, %c0_i32_0 : i32, i32, i32
  }
  func.func @transform_1(%arg0: i32) -> (i32, i32, i32) {
    %c0_i32 = arith.constant 0 : i32
    %c0_i32_0 = arith.constant 0 : i32
    %c0_i32_1 = arith.constant 0 : i32
    %c0_i32_2 = arith.constant 0 : i32
    return %c0_i32, %c0_i32_0, %c0_i32_1 : i32, i32, i32
  }
  func.func @transform_2(%arg0: i32) -> (i32, i32, i32) {
    %c0_i32 = arith.constant 0 : i32
    %c0_i32_0 = arith.constant 0 : i32
    %c0_i32_1 = arith.constant 0 : i32
    %c0_i32_2 = arith.constant 0 : i32
    return %c0_i32, %c0_i32_0, %c0_i32_1 : i32, i32, i32
  }
  func.func @transform_3(%arg0: i32) -> (i32, i32) {
    %c0_i32 = arith.constant 0 : i32
    %c0_i32_0 = arith.constant 0 : i32
    return %arg0, %c0_i32 : i32, i32
  }
}

</mosaic_0001>

<llo_original>
// kernel: tpu_custom_call.1
$region0: #{tpu_custom_call.1}
  #allocation0 [shape = 'u32[]', space=smem, size = 0x4, offset = 0x4, fixed_abs, tag = 'smem constant byte address 0x4 - core index']
  #allocation1 [shape = 'u32[144,128]{1,0:T(1,128)}', space=vmem, size = 0x12000, scoped, tag = 'internal scratch']
  %s0 = inlined_call_operand.hbm [shape: f32[2,8,32], index: 0, kind: input, shape index: {}]
  %s1 = inlined_call_operand.vmem [shape: f32[1,1,32], index: 1, kind: input, shape index: {}]
  %s2 = inlined_call_operand.vmem [shape: f32[1,8,1], index: 2, kind: input, shape index: {}]
  %s3 = inlined_call_operand.hbm [shape: f32[2,32], index: 3, kind: output, shape index: {}]
  %s4 = sld [smem:[#allocation0]]
  $region26: #{tpu_custom_call.1} parent=0
    _
  %s6 = ssub.s32 1, %s4
  %s7 = scalar_select 0, %s6, %s4
  $region1: #{tpu_custom_call.1} parent=0
    #allocation2 [shape = 'u8[8192]{0}', space=vmem, size = 0x2000, scoped, tag = 'input window, operand 0, single buffered']
    #allocation3 [shape = 's32[1]{0}', space=sflag, size = 0x4, scoped, tag = 'scoped memory for tpu_custom_call.1']
    #allocation4 [shape = 's32[1]{0}', space=sflag, size = 0x4, scoped, tag = 'scoped memory for tpu_custom_call.1']
    #allocation5 [shape = 'u8[1024]{0}', space=vmem, size = 0x400, scoped, tag = 'output window, operand 0, single buffered']
    %8 = vsyncpa [#allocation3], 0
    %9 = vsyncpa [#allocation4], 0
    // Predicated region
    $region2: #{tpu_custom_call.1} parent=1 // pred_check
      _
    $region3: #{tpu_custom_call.1} parent=1 // pred_check_branch
      %11 = sbr.rel (0) target = $region5
    $region4: #{tpu_custom_call.1} parent=1 // pred_region
      %s13 = ssub.s32 256, 256
      %14 = vsyncadd [#allocation3], %s13
      %s15 = sshll.u32 [#allocation2], 4
      %s16 = int_to_ptr.vmem [resolvable:$true] %s15
      %21 = dma.hbm_to_vmem [thread:$0]  %s0, 256, %s16, [#allocation3], 128, 128, 8
    $region5: #{tpu_custom_call.1} parent=1 // pred_fallthru
      _
    // Predicated region
    $region6: #{tpu_custom_call.1} parent=1 // pred_check
      _
    $region7: #{tpu_custom_call.1} parent=1 // pred_check_branch
      %23 = sbr.rel (0) target = $region9
    $region8: #{tpu_custom_call.1} parent=1 // pred_region
      _
    $region9: #{tpu_custom_call.1} parent=1 // pred_fallthru
      _
    // Predicated region
    $region10: #{tpu_custom_call.1} parent=1 // pred_check
      _
    $region11: #{tpu_custom_call.1} parent=1 // pred_check_branch
      %25 = sbr.rel (0) target = $region13
    $region12: #{tpu_custom_call.1} parent=1 // pred_region
      _
    $region13: #{tpu_custom_call.1} parent=1 // pred_fallthru
      _
    // Predicated region
    $region14: #{tpu_custom_call.1} parent=1 // pred_check
      _
    $region15: #{tpu_custom_call.1} parent=1 // pred_check_branch
      %27 = sbr.rel (0) target = $region17
    $region16: #{tpu_custom_call.1} parent=1 // pred_region
      %28 = dma.done [#allocation3], 256
    $region17: #{tpu_custom_call.1} parent=1 // pred_fallthru
      _
    %v29 = vld [vmem:[#allocation2] sm:$0xff]
    %v30 = vld [vmem:[#allocation2 + $0x8] sm:$0xff]
    %v31 = vld [vmem:[%s1] sm:$0x1]
    %v32 = vld [vmem:[%s2] sm:$0xff]
    %v34 = vlaneseq
    %v35 = vshrl.u32 %v34, 7
    %v36 = vsub.s32 0, %v35
    %v37 = vrot.slane %v31, %v36
    %v39 = vmul.f32 %v29, %v37
    %v40 = vmul.f32 %v30, %v37
    %vm41 = vcmask 261120
    %v42 = vsel %vm41, %v39, 0.0
    %43 = vadd.xlane.f32.xlu0 %v42
    %v44 = vpop.xlane.xlu0 %43
    %v45 = vsel %vm41, %v40, 0.0
    %46 = vadd.xlane.f32.xlu0 %v45
    %v47 = vpop.xlane.xlu0 %46
    %v48 = vadd.f32 %v44, %v32
    %v49 = vadd.f32 %v47, %v32
    %v50 = vtanh.pop %v48
    %v51 = vtanh.pop %v49
    %vm52 = vcmask 7168
    %v53 = vsel %vm52, %v50, -inf
    %v54 = vrot.slane %v53, 4
    %v55 = vmax.f32 %v53, %v54
    %v56 = vrot.slane %v55, 2
    %v57 = vmax.f32 %v55, %v56
    %v58 = vrot.slane %v57, 1
    %v59 = vmax.f32 %v57, %v58
    %v60 = vsel %vm52, %v51, -inf
    %v61 = vrot.slane %v60, 4
    %v62 = vmax.f32 %v60, %v61
    %v63 = vrot.slane %v62, 2
    %v64 = vmax.f32 %v62, %v63
    %v65 = vrot.slane %v64, 1
    %v66 = vmax.f32 %v64, %v65
    %v67 = vsub.f32 %v50, %v59
    %v68 = vsub.f32 %v51, %v66
    %v69 = vmul.f32 %v67, 1.442695
    %v70 = vpow.pop %v69
    %v71 = vmul.f32 %v68, 1.442695
    %v72 = vpow.pop %v71
    %v73 = vsel %vm52, %v70, 0.0
    %v74 = vrot.slane %v73, 4
    %v75 = vadd.f32 %v73, %v74
    %v76 = vrot.slane %v75, 2
    %v77 = vadd.f32 %v75, %v76
    %v78 = vrot.slane %v77, 1
    %v79 = vadd.f32 %v77, %v78
    %v80 = vsel %vm52, %v72, 0.0
    %v81 = vrot.slane %v80, 4
    %v82 = vadd.f32 %v80, %v81
    %v83 = vrot.slane %v82, 2
    %v84 = vadd.f32 %v82, %v83
    %v85 = vrot.slane %v84, 1
    %v86 = vadd.f32 %v84, %v85
    %v87 = vrcp.pop %v79
    %v88 = vmul.f32 %v70, %v87
    %v89 = vrcp.pop %v86
    %v90 = vmul.f32 %v72, %v89
    %92 = vset.pattern.permute.xlu0 0
    %93 = vperm.xlu0 %92, %v88
    %v94 = vpop.permute.xlu0 %93
    %97 = vset.pattern.permute.xlu0 0
    %98 = vperm.xlu0 %97, %v90
    %v99 = vpop.permute.xlu0 %98
    %v101 = vmul.f32 %v94, %v29
    %v102 = vmul.f32 %v99, %v30
    %v103 = vsel %vm41, %v101, 0.0
    %v104 = vrot.slane %v103, 4
    %v105 = vadd.f32 %v103, %v104
    %v106 = vrot.slane %v105, 2
    %v107 = vadd.f32 %v105, %v106
    %v108 = vrot.slane %v107, 1
    %v109 = vadd.f32 %v107, %v108
    %v110 = vsel %vm41, %v102, 0.0
    %v111 = vrot.slane %v110, 4
    %v112 = vadd.f32 %v110, %v111
    %v113 = vrot.slane %v112, 2
    %v114 = vadd.f32 %v112, %v113
    %v115 = vrot.slane %v114, 1
    %v116 = vadd.f32 %v114, %v115
    %vm119 = vcmask 1041409
    %v120 = vsel %vm119, %v116, %v109
    %vm122 = vcmask 254976
    %123 = vst.msk [vmem:[#allocation5] sm:$0x3] %vm122, %v120
    // Predicated region
    $region18: #{tpu_custom_call.1} parent=1 // pred_check
      _
    $region19: #{tpu_custom_call.1} parent=1 // pred_check_branch
      %125 = sbr.rel (0) target = $region21
    $region20: #{tpu_custom_call.1} parent=1 // pred_region
      %s127 = ssub.s32 32, 32
      %128 = vsyncadd [#allocation4], %s127
      %s130 = sshll.u32 [#allocation5], 4
      %s131 = int_to_ptr.vmem [resolvable:$true] %s130
      %133 = dma.vmem_to_hbm [thread:$0]  %s131, 32, %s3, [#allocation4]
    $region21: #{tpu_custom_call.1} parent=1 // pred_fallthru
      _
    // Predicated region
    $region22: #{tpu_custom_call.1} parent=1 // pred_check
      _
    $region23: #{tpu_custom_call.1} parent=1 // pred_check_branch
      %135 = sbr.rel (0) target = $region25
    $region24: #{tpu_custom_call.1} parent=1 // pred_region
      %136 = dma.done [#allocation4], 32
    $region25: #{tpu_custom_call.1} parent=1 // pred_fallthru
      _
    %137 = vsyncpa [#allocation3], 1
    %138 = vsyncpa [#allocation4], 1

</llo_original>
